<compile_context>
chip_gen: v6e
topology: v6e:2x2x1
jax: 0.10.0
libtpu: 0.0.40
codegen_flags: <defaults>
</compile_context>

<pallas_src>
import functools
import math

import jax
import jax.numpy as jnp
import numpy as np
from jax.experimental import pallas as pl
from jax.experimental.pallas import tpu as pltpu


def build_pe(d_model: int, max_len: int = 500, dtype=jnp.float32):
    """Sinusoidal table, same math as the torch module __init__.  Shape (max_len, 1, d_model)."""
    position = np.arange(0, max_len, dtype=np.float32)[:, None]              # (max_len, 1)
    div_term = np.exp(
        np.arange(0, d_model, 2, dtype=np.float32) * (-math.log(10000.0) / d_model)
    )                                                                        # (d_model/2,)
    pe = np.zeros((max_len, d_model), dtype=np.float32)
    pe[:, 0::2] = np.sin(position * div_term)
    pe[:, 1::2] = np.cos(position * div_term)
    return jnp.asarray(pe[:, None, :], dtype=dtype)                          # (max_len, 1, d_model)


def _pe_add_kernel(x_ref, pe_ref, o_ref, *, batch: int, d_model: int):
    # x_ref / o_ref : (seq_tile, batch * d_model)   lane-dense slab
    # pe_ref        : (seq_tile, d_model)
    pe_tile = pe_ref[...]
    # Static unroll over the batch copies: each chunk is an aligned
    # (seq_tile, d_model) lane-slice, so no (seq_tile, B*D) broadcast of pe is
    # ever materialized in VMEM and no in-kernel relayout/reshape is needed.
    # (For very large batch, switch to lax.fori_loop with
    #  pl.ds(pl.multiple_of(b * d_model, 128), d_model).)
    for b in range(batch):
        sl = slice(b * d_model, (b + 1) * d_model)
        o_ref[:, sl] = x_ref[:, sl] + pe_tile


def positional_encoding_forward(x, pe, *, target_block_bytes: int = 4 << 20,
                                inplace: bool = False):
    """x: (S, B, D); pe: (max_len, 1, D) or (max_len, D).  Returns x + pe[:S] (eval-mode dropout)."""
    S, B, D = x.shape
    pe2 = pe.reshape(pe.shape[0], pe.shape[-1])          # (max_len, D)
    max_len = pe2.shape[0]
    if S > max_len:
        raise ValueError(f"seq_len={S} exceeds positional table max_len={max_len}")
    if pe2.shape[-1] != D:
        raise ValueError(f"pe d_model={pe2.shape[-1]} does not match x d_model={D}")
    pe2 = pe2.astype(x.dtype)                            # keep pe in x.dtype: no per-tile convert
    x2 = x.reshape(S, B * D)                             # free: contiguous-dim merge

    itemsize = np.dtype(x.dtype).itemsize
    row_bytes = B * D * itemsize
    sub = max(8, 32 // itemsize)                         # sublane tile: 8 f32 / 16 bf16 / 32 int8

    # Rows per block from the VMEM budget, rounded to the sublane tile.
    st = max(sub, (target_block_bytes // max(row_bytes, 1)) // sub * sub)
    if S >= 2 * sub:
        # keep >= 2 grid steps so v7x's two TensorCores both get work
        st = min(st, pl.cdiv(pl.cdiv(S, 2), sub) * sub)
    st = min(st, S)
    grid = (pl.cdiv(S, st),)                             # partial final block handles ragged S

    # x + out blocks double-buffered, plus (tiny) pe blocks, plus headroom.
    # Raised above the 16/32 MiB scoped defaults, capped to stay v7x-safe.
    block_bytes = st * row_bytes
    vmem_limit = int(min(64 << 20,
                         max(32 << 20, 4 * block_bytes + 2 * st * D * itemsize + (8 << 20))))

    kernel = functools.partial(_pe_add_kernel, batch=B, d_model=D)
    out2 = pl.pallas_call(
        kernel,
        out_shape=jax.ShapeDtypeStruct((S, B * D), x.dtype),
        grid=grid,
        in_specs=[
            pl.BlockSpec((st, B * D), lambda i: (i, 0)),   # x slab
            pl.BlockSpec((st, D), lambda i: (i, 0)),       # pe rows (broadcast over B in-kernel)
        ],
        out_specs=pl.BlockSpec((st, B * D), lambda i: (i, 0)),
        # Optional in-place update (writes the result into x's buffer; caller
        # must treat x as donated).
        input_output_aliases=({0: 0} if inplace else {}),
        compiler_params=pltpu.CompilerParams(
            dimension_semantics=("parallel",),
            vmem_limit_bytes=vmem_limit,
        ),
    )(x2, pe2)
    return out2.reshape(S, B, D)


if __name__ == "__main__":
    max_len = 500
    k1, k2 = jax.random.split(jax.random.PRNGKey(0))

    # Small shapes consistent with the module forward: (seq_len, batch, d_model)
    S, B, D = 8, 2, 128
    x = jax.random.normal(k1, (S, B, D), dtype=jnp.float32)
    pe = build_pe(D, max_len=max_len, dtype=jnp.float32)
    out = jax.block_until_ready(positional_encoding_forward(x, pe))
    ref = x + pe[:S]                                     # dropout is identity in eval mode
    np.testing.assert_allclose(np.asarray(out), np.asarray(ref), rtol=1e-6, atol=1e-6)

    # Multi-step grid, partial final block (ragged S), bf16 path.
    S2, B2, D2 = 40, 4, 128
    xb = jax.random.normal(k2, (S2, B2, D2), dtype=jnp.float32).astype(jnp.bfloat16)
    peb = build_pe(D2, max_len=max_len, dtype=jnp.bfloat16)
    outb = jax.block_until_ready(positional_encoding_forward(xb, peb))
    refb = xb + peb[:S2]
    np.testing.assert_allclose(np.asarray(outb, dtype=np.float32),
                               np.asarray(refb, dtype=np.float32), rtol=2e-2, atol=2e-2)

    print("KERNEL_OK")
</pallas_src>

<mosaic_0001>
module attributes {stable_mosaic.version = 11 : i64} {
  func.func @_pe_add_kernel(%arg0: i32, %arg1: memref<8x256xf32, #tpu.memory_space<vmem>>, %arg2: memref<8x128xf32, #tpu.memory_space<vmem>>, %arg3: memref<8x256xf32, #tpu.memory_space<vmem>>) attributes {dimension_semantics = [#tpu.dimension_semantics<parallel>], iteration_bounds = array<i64: 1>, scalar_prefetch = 0 : i64, scratch_operands = 0 : i64, tpu.core_type = #tpu.core_type<tc>, window_params = [{transform_indices = @transform_0, window_bounds = array<i64: 8, 256>}, {transform_indices = @transform_1, window_bounds = array<i64: 8, 128>}, {transform_indices = @transform_2, window_bounds = array<i64: 8, 256>}]} {
    %c0 = arith.constant 0 : index
    %c0_0 = arith.constant 0 : index
    %0 = vector.load %arg2[%c0, %c0_0] : memref<8x128xf32, #tpu.memory_space<vmem>>, vector<8x128xf32>
    %c0_1 = arith.constant 0 : index
    %c0_2 = arith.constant 0 : index
    %1 = vector.load %arg1[%c0_1, %c0_2] : memref<8x256xf32, #tpu.memory_space<vmem>>, vector<8x128xf32>
    %2 = arith.addf %1, %0 : vector<8x128xf32>
    %c0_3 = arith.constant 0 : index
    %c0_4 = arith.constant 0 : index
    %3 = vector.load %arg3[%c0_3, %c0_4] : memref<8x256xf32, #tpu.memory_space<vmem>>, vector<8x128xf32>
    tpu.vector_store %arg3[%c0_3, %c0_4], %2 {strides = array<i32>} : memref<8x256xf32, #tpu.memory_space<vmem>>, vector<8x128xf32>,
    %c0_5 = arith.constant 0 : index
    %c128 = arith.constant 128 : index
    %4 = vector.load %arg1[%c0_5, %c128] : memref<8x256xf32, #tpu.memory_space<vmem>>, vector<8x128xf32>
    %5 = arith.addf %4, %0 : vector<8x128xf32>
    %c0_6 = arith.constant 0 : index
    %c128_7 = arith.constant 128 : index
    %6 = vector.load %arg3[%c0_6, %c128_7] : memref<8x256xf32, #tpu.memory_space<vmem>>, vector<8x128xf32>
    tpu.vector_store %arg3[%c0_6, %c128_7], %5 {strides = array<i32>} : memref<8x256xf32, #tpu.memory_space<vmem>>, vector<8x128xf32>,
    return
  }
  func.func @transform_0(%arg0: i32) -> (i32, i32) {
    %c0_i32 = arith.constant 0 : i32
    %c0_i32_0 = arith.constant 0 : i32
    return %arg0, %c0_i32 : i32, i32
  }
  func.func @transform_1(%arg0: i32) -> (i32, i32) {
    %c0_i32 = arith.constant 0 : i32
    %c0_i32_0 = arith.constant 0 : i32
    return %arg0, %c0_i32 : i32, i32
  }
  func.func @transform_2(%arg0: i32) -> (i32, i32) {
    %c0_i32 = arith.constant 0 : i32
    %c0_i32_0 = arith.constant 0 : i32
    return %arg0, %c0_i32 : i32, i32
  }
}

</mosaic_0001>

<llo_original>
// kernel: tpu_custom_call.1
$region0: #{tpu_custom_call.1}
  #allocation0 [shape = 'u32[]', space=smem, size = 0x4, offset = 0x4, fixed_abs, tag = 'smem constant byte address 0x4 - core index']
  #allocation1 [shape = 'u32[144,128]{1,0:T(1,128)}', space=vmem, size = 0x12000, scoped, tag = 'internal scratch']
  %s0 = inlined_call_operand.hbm [shape: f32[8,256], index: 0, kind: input, shape index: {}]
  %s1 = inlined_call_operand.hbm [shape: f32[500,128], index: 1, kind: input, shape index: {}]
  %s2 = inlined_call_operand.hbm [shape: f32[8,256], index: 2, kind: output, shape index: {}]
  %s3 = sld [smem:[#allocation0]]
  $region26: #{tpu_custom_call.1} parent=0
    _
  %s5 = ssub.s32 1, %s3
  %s6 = scalar_select 0, %s5, %s3
  $region1: #{tpu_custom_call.1} parent=0
    #allocation2 [shape = 'u8[8192]{0}', space=vmem, size = 0x2000, scoped, tag = 'input window, operand 0, single buffered']
    #allocation3 [shape = 's32[1]{0}', space=sflag, size = 0x4, scoped, tag = 'scoped memory for tpu_custom_call.1']
    #allocation4 [shape = 's32[1]{0}', space=sflag, size = 0x4, scoped, tag = 'scoped memory for tpu_custom_call.1']
    #allocation5 [shape = 'u8[4096]{0}', space=vmem, size = 0x1000, scoped, tag = 'input window, operand 1, single buffered']
    #allocation6 [shape = 's32[1]{0}', space=sflag, size = 0x4, scoped, tag = 'scoped memory for tpu_custom_call.1']
    #allocation7 [shape = 'u8[8192]{0}', space=vmem, size = 0x2000, scoped, tag = 'output window, operand 0, single buffered']
    %7 = vsyncpa [#allocation3], 0
    %8 = vsyncpa [#allocation6], 0
    %9 = vsyncpa [#allocation4], 0
    // Predicated region
    $region2: #{tpu_custom_call.1} parent=1 // pred_check
      _
    $region3: #{tpu_custom_call.1} parent=1 // pred_check_branch
      %11 = sbr.rel (0) target = $region5
    $region4: #{tpu_custom_call.1} parent=1 // pred_region
      %s13 = ssub.s32 256, 256
      %14 = vsyncadd [#allocation3], %s13
      %s16 = sshll.u32 [#allocation2], 4
      %s17 = int_to_ptr.vmem [resolvable:$true] %s16
      %19 = dma.hbm_to_vmem [thread:$0]  %s0, 256, %s17, [#allocation3]
    $region5: #{tpu_custom_call.1} parent=1 // pred_fallthru
      _
    // Predicated region
    $region6: #{tpu_custom_call.1} parent=1 // pred_check
      _
    $region7: #{tpu_custom_call.1} parent=1 // pred_check_branch
      %21 = sbr.rel (0) target = $region9
    $region8: #{tpu_custom_call.1} parent=1 // pred_region
      %s23 = ssub.s32 128, 128
      %24 = vsyncadd [#allocation6], %s23
      %s26 = sshll.u32 [#allocation5], 4
      %s27 = int_to_ptr.vmem [resolvable:$true] %s26
      %29 = dma.hbm_to_vmem [thread:$0]  %s1, 128, %s27, [#allocation6]
    $region9: #{tpu_custom_call.1} parent=1 // pred_fallthru
      _
    // Predicated region
    $region10: #{tpu_custom_call.1} parent=1 // pred_check
      _
    $region11: #{tpu_custom_call.1} parent=1 // pred_check_branch
      %31 = sbr.rel (0) target = $region13
    $region12: #{tpu_custom_call.1} parent=1 // pred_region
      %32 = dma.done [#allocation3], 256
    $region13: #{tpu_custom_call.1} parent=1 // pred_fallthru
      _
    // Predicated region
    $region14: #{tpu_custom_call.1} parent=1 // pred_check
      _
    $region15: #{tpu_custom_call.1} parent=1 // pred_check_branch
      %34 = sbr.rel (0) target = $region17
    $region16: #{tpu_custom_call.1} parent=1 // pred_region
      %35 = dma.done [#allocation6], 128
    $region17: #{tpu_custom_call.1} parent=1 // pred_fallthru
      _
    %v36 = vld [vmem:[#allocation5] sm:$0xff]
    %v37 = vld [vmem:[#allocation2] sm:$0xff]
    %v38 = vadd.f32 %v37, %v36
    %39 = vst [vmem:[#allocation7] sm:$0xff] %v38
    %v40 = vld [vmem:[#allocation2 + $0x8] sm:$0xff]
    %v41 = vadd.f32 %v40, %v36
    %42 = vst [vmem:[#allocation7 + $0x8] sm:$0xff] %v41
    // Predicated region
    $region18: #{tpu_custom_call.1} parent=1 // pred_check
      _
    $region19: #{tpu_custom_call.1} parent=1 // pred_check_branch
      %44 = sbr.rel (0) target = $region21
    $region20: #{tpu_custom_call.1} parent=1 // pred_region
      %s46 = ssub.s32 256, 256
      %47 = vsyncadd [#allocation4], %s46
      %s49 = sshll.u32 [#allocation7], 4
      %s50 = int_to_ptr.vmem [resolvable:$true] %s49
      %52 = dma.vmem_to_hbm [thread:$0]  %s50, 256, %s2, [#allocation4]
    $region21: #{tpu_custom_call.1} parent=1 // pred_fallthru
      _
    // Predicated region
    $region22: #{tpu_custom_call.1} parent=1 // pred_check
      _
    $region23: #{tpu_custom_call.1} parent=1 // pred_check_branch
      %54 = sbr.rel (0) target = $region25
    $region24: #{tpu_custom_call.1} parent=1 // pred_region
      %55 = dma.done [#allocation4], 256
    $region25: #{tpu_custom_call.1} parent=1 // pred_fallthru
      _
    %56 = vsyncpa [#allocation3], 1
    %57 = vsyncpa [#allocation6], 1
    %58 = vsyncpa [#allocation4], 1

</llo_original>
